<compile_context>
chip_gen: v5e
topology: v5e:2x2
jax: 0.10.0
libtpu: 0.0.40
codegen_flags: <defaults>
</compile_context>

<pallas_src>
import math
from functools import partial

import jax
import jax.numpy as jnp
from jax import lax
from jax.experimental import pallas as pl
from jax.experimental.pallas import tpu as pltpu


_MASK_FILL = -1e30   # finite fill for out-of-window scores (never produces NaN)
_NEG_INIT = -1e9     # running-max init; > _MASK_FILL so fully-skipped steps stay clean


# ---------------------------------------------------------------------------
# in-kernel math helpers
# ---------------------------------------------------------------------------
def _layernorm(x, eps=1e-6):
    # nn.LayerNorm(elementwise_affine=False, eps=1e-6): biased variance over last dim
    mu = jnp.mean(x, axis=-1, keepdims=True)
    var = jnp.mean((x - mu) ** 2, axis=-1, keepdims=True)
    return (x - mu) * lax.rsqrt(var + eps)


def _gelu_tanh(x):
    # nn.GELU(approximate='tanh')
    c0 = math.sqrt(2.0 / math.pi)
    return 0.5 * x * (1.0 + jnp.tanh(c0 * (x + 0.044715 * x * x * x)))


def _auto_vmem_limit():
    """~80% of physical VMEM; None (compiler default) if the query is unavailable."""
    try:
        cap = getattr(pltpu.get_tpu_info(), "vmem_capacity_bytes", None)
        if cap:
            return int(cap * 13 // 16)
    except Exception:
        pass
    return None


# ---------------------------------------------------------------------------
# Kernel 1: LayerNorm + adaLN modulate + fused qkv projection, head-split output
#   grid = (B, N // token_tile); writes q/k/v in (B, H, N, Dh)
# ---------------------------------------------------------------------------
def qkv_kernel(x_ref, ada_ref, w_ref, b_ref, q_ref, k_ref, v_ref, *, num_heads):
    C = x_ref.shape[-1]
    H = num_heads
    Dh = C // H

    x = x_ref[...].astype(jnp.float32)            # (TN, C)
    ada = ada_ref[...].astype(jnp.float32)        # (6, C)
    shift_msa, scale_msa = ada[0:1], ada[1:2]

    h = _layernorm(x) * (1.0 + scale_msa) + shift_msa
    hc = h.astype(w_ref.dtype)                    # bf16 operands when weights are bf16

    # one MXU pass over the fused (C, 3C) weight instead of three K=C pushes
    y = jnp.dot(hc, w_ref[...], preferred_element_type=jnp.float32)
    y = (y + b_ref[...].astype(jnp.float32)).astype(q_ref.dtype)   # (TN, 3C)

    # write per-head so kernel 2 consumes (B, H, N, Dh) with no XLA transpose pass
    for hh in range(H):
        q_ref[hh] = y[:, hh * Dh:(hh + 1) * Dh]
        k_ref[hh] = y[:, C + hh * Dh:C + (hh + 1) * Dh]
        v_ref[hh] = y[:, 2 * C + hh * Dh:2 * C + (hh + 1) * Dh]


# ---------------------------------------------------------------------------
# Kernel 2: flash attention (online softmax) + output projection + gated residual
#   grid = (B, N // q_tile, kv_steps); kv axis is the "arbitrary" reduction axis.
#   For windowed attention, kv_steps < n_kv_tiles and the k/v index_map adds a
#   per-q-tile prefetched start offset so out-of-window tiles are never fetched.
# ---------------------------------------------------------------------------
def attn_kernel(kv_start_ref, ada_ref, x_ref, q_ref, k_ref, v_ref,
                wp_ref, bp_ref, o_ref,
                m_sc, l_sc, acc_sc, cat_sc, *, window_size):
    H, TQ, Dh = q_ref.shape
    TK = k_ref.shape[1]
    C = x_ref.shape[-1]

    qt = pl.program_id(1)
    kt = pl.program_id(2)
    num_kt = pl.num_programs(2)
    kv_idx = kv_start_ref[qt] + kt                # actual kv block index

    @pl.when(kt == 0)
    def _init():
        m_sc[...] = jnp.full_like(m_sc, _NEG_INIT)
        l_sc[...] = jnp.zeros_like(l_sc)
        acc_sc[...] = jnp.zeros_like(acc_sc)

    sm_scale = Dh ** (-0.5)

    def _update():
        q = q_ref[...]                            # (H, TQ, Dh)
        k = k_ref[...]                            # (H, TK, Dh)
        # head-batched q @ k^T without materializing a transpose
        s = lax.dot_general(
            q, k, (((2,), (2,)), ((0,), (0,))),
            preferred_element_type=jnp.float32) * sm_scale        # (H, TQ, TK)

        if window_size is not None:
            half = window_size // 2
            # single hoisted iota pair + scalar offset (no per-step row/col adds)
            rel = (lax.broadcasted_iota(jnp.int32, (TQ, TK), 0)
                   - lax.broadcasted_iota(jnp.int32, (TQ, TK), 1))
            off = qt * TQ - kv_idx * TK
            band = jnp.abs(rel + off) <= half
            s = jnp.where(band[None], s, _MASK_FILL)

        m_prev = m_sc[...]                                        # (H, TQ, 1)
        m_new = jnp.maximum(m_prev, jnp.max(s, axis=-1, keepdims=True))
        alpha = jnp.exp(m_prev - m_new)
        p = jnp.exp(s - m_new)                                    # (H, TQ, TK)
        l_sc[...] = alpha * l_sc[...] + jnp.sum(p, axis=-1, keepdims=True)
        pv = lax.dot_general(
            p.astype(v_ref.dtype), v_ref[...], (((2,), (1,)), ((0,), (0,))),
            preferred_element_type=jnp.float32)                   # (H, TQ, Dh)
        acc_sc[...] = alpha * acc_sc[...] + pv
        m_sc[...] = m_new

    if window_size is None:
        _update()
    else:
        half = window_size // 2
        q_lo = qt * TQ
        k_lo = kv_idx * TK
        intersects = jnp.logical_and(k_lo <= q_lo + (TQ - 1) + half,
                                     k_lo + (TK - 1) >= q_lo - half)
        pl.when(intersects)(_update)              # skip non-intersecting edge tiles

    @pl.when(kt == num_kt - 1)
    def _finalize():
        ada = ada_ref[...].astype(jnp.float32)    # (6, C)
        gate_msa = ada[2:3]

        inv_l = pl.reciprocal(l_sc[...], approx=True)             # (H, TQ, 1)
        attn_h = acc_sc[...] * inv_l                              # (H, TQ, Dh), f32

        # pack heads into the lane dim once, then a single K=C projection matmul
        for hh in range(H):
            cat_sc[:, hh * Dh:(hh + 1) * Dh] = attn_h[hh]
        attn_proj = jnp.dot(cat_sc[...].astype(wp_ref.dtype), wp_ref[...],
                            preferred_element_type=jnp.float32)
        attn_proj = attn_proj + bp_ref[...].astype(jnp.float32)   # (TQ, C)

        o_ref[...] = (x_ref[...].astype(jnp.float32)
                      + gate_msa * attn_proj).astype(o_ref.dtype)


# ---------------------------------------------------------------------------
# Kernel 3: streamed MLP (LN2 + modulate + fc1 + tanh-GELU + fc2) + gated residual
#   grid = (B, N // token_tile, Cm // cm_tile); the Cm axis streams w_fc1/w_fc2
#   column/row chunks (double-buffered) instead of keeping them VMEM-resident.
# ---------------------------------------------------------------------------
def mlp_kernel(ada_ref, x1_ref, w1_ref, b1_ref, w2_ref, b2_ref, o_ref,
               h_sc, acc_sc):
    j = pl.program_id(2)
    num_j = pl.num_programs(2)

    @pl.when(j == 0)
    def _init():
        ada = ada_ref[...].astype(jnp.float32)
        shift_mlp, scale_mlp = ada[3:4], ada[4:5]
        x1 = x1_ref[...].astype(jnp.float32)
        h_sc[...] = _layernorm(x1) * (1.0 + scale_mlp) + shift_mlp
        acc_sc[...] = jnp.zeros_like(acc_sc)

    h = h_sc[...].astype(w1_ref.dtype)
    u = jnp.dot(h, w1_ref[...], preferred_element_type=jnp.float32)
    u = _gelu_tanh(u + b1_ref[...].astype(jnp.float32))
    acc_sc[...] += jnp.dot(u.astype(w2_ref.dtype), w2_ref[...],
                           preferred_element_type=jnp.float32)

    @pl.when(j == num_j - 1)
    def _finalize():
        ada = ada_ref[...].astype(jnp.float32)
        gate_mlp = ada[5:6]
        mlp_out = acc_sc[...] + b2_ref[...].astype(jnp.float32)
        o_ref[...] = (x1_ref[...].astype(jnp.float32)
                      + gate_mlp * mlp_out).astype(o_ref.dtype)


# ---------------------------------------------------------------------------
# wrapper
# ---------------------------------------------------------------------------
def dit_block_pallas(x, c, params, *, num_heads, window_size=None,
                     q_tile=None, kv_tile=None, cm_tile=None,
                     vmem_limit_bytes=None):
    B, N, C = x.shape
    H = num_heads
    assert C % H == 0
    Dh = C // H
    if window_size is not None:
        if not isinstance(window_size, int) or window_size <= 0 or window_size % 2 == 0:
            raise ValueError("window_size must be a positive odd integer")

    # tile defaults: 256 feeds the 256-wide MXU on v6e/v7x; on v5e 128 is optimal.
    if q_tile is None:
        if N <= 256:
            q_tile = N
        elif N % 256 == 0:
            q_tile = 256
        elif N % 128 == 0:
            q_tile = 128
        else:
            q_tile = N
    if kv_tile is None:
        kv_tile = q_tile
    assert N % q_tile == 0 and N % kv_tile == 0
    assert q_tile == N or q_tile % 8 == 0
    assert kv_tile == N or kv_tile % 8 == 0

    Cm = params["w_fc1"].shape[1]
    if cm_tile is None:
        cm_tile = Cm
        for cand in (1024, 512, 256, 128):
            if Cm % cand == 0:
                cm_tile = cand
                break
    assert Cm % cm_tile == 0
    assert cm_tile == Cm or cm_tile % 128 == 0

    if vmem_limit_bytes is None:
        vmem_limit_bytes = _auto_vmem_limit()

    f32 = jnp.float32
    n_q_tiles = N // q_tile
    n_kv_tiles = N // kv_tile
    n_cm_tiles = Cm // cm_tile

    # --- hoisted adaLN modulation: SiLU(c) @ W_ada + b_ada (tiny M=B matmul) ----
    cf = c.astype(f32)
    ada = (cf * jax.nn.sigmoid(cf)) @ params["w_ada"].astype(f32) \
        + params["b_ada"].astype(f32)                              # (B, 6C)
    ada = ada.reshape(B, 6, C)
    # rows: 0 shift_msa, 1 scale_msa, 2 gate_msa, 3 shift_mlp, 4 scale_mlp, 5 gate_mlp

    # --- per-q-tile kv start table: restrict the kv grid for windowed attention --
    if window_size is None:
        kv_steps = n_kv_tiles
        kv_start = jnp.zeros((n_q_tiles,), jnp.int32)
    else:
        half = window_size // 2
        starts, kv_steps = [], 1
        for i in range(n_q_tiles):
            lo = max(0, i * q_tile - half) // kv_tile
            hi = min(N - 1, i * q_tile + (q_tile - 1) + half) // kv_tile
            starts.append(lo)
            kv_steps = max(kv_steps, hi - lo + 1)
        starts = [min(s, n_kv_tiles - kv_steps) for s in starts]
        kv_start = jnp.asarray(starts, dtype=jnp.int32)

    # weight/bias specs: constant index_map + single-buffered (no 2x VMEM hold)
    def const_spec(a):
        nd = a.ndim
        return pl.BlockSpec(a.shape, lambda *_, _nd=nd: (0,) * _nd,
                            pipeline_mode=pl.Buffered(1))

    cparams = lambda sem: pltpu.CompilerParams(
        dimension_semantics=sem, vmem_limit_bytes=vmem_limit_bytes)

    # ------------------------- kernel 1: fused qkv projection -------------------
    q, k, v = pl.pallas_call(
        partial(qkv_kernel, num_heads=H),
        out_shape=(jax.ShapeDtypeStruct((B, H, N, Dh), x.dtype),) * 3,
        grid_spec=pltpu.PrefetchScalarGridSpec(
            num_scalar_prefetch=0,
            grid=(B, n_q_tiles),
            in_specs=[
                pl.BlockSpec((pl.Squeezed(), q_tile, C), lambda b, n: (b, n, 0)),
                pl.BlockSpec((pl.Squeezed(), 6, C), lambda b, n: (b, 0, 0)),
                const_spec(params["w_qkv"]), const_spec(params["b_qkv"]),
            ],
            out_specs=(pl.BlockSpec((pl.Squeezed(), H, q_tile, Dh),
                                    lambda b, n: (b, 0, n, 0)),) * 3,
        ),
        compiler_params=cparams(("parallel", "parallel")),
    )(x, ada, params["w_qkv"], params["b_qkv"])

    # -------------------- kernel 2: flash attention + proj + residual ------------
    x1 = pl.pallas_call(
        partial(attn_kernel, window_size=window_size),
        out_shape=jax.ShapeDtypeStruct((B, N, C), x.dtype),
        grid_spec=pltpu.PrefetchScalarGridSpec(
            num_scalar_prefetch=1,                 # kv_start table -> SMEM
            grid=(B, n_q_tiles, kv_steps),
            in_specs=[
                pl.BlockSpec((pl.Squeezed(), 6, C), lambda b, i, j, kvs: (b, 0, 0)),
                pl.BlockSpec((pl.Squeezed(), q_tile, C), lambda b, i, j, kvs: (b, i, 0)),
                pl.BlockSpec((pl.Squeezed(), H, q_tile, Dh),
                             lambda b, i, j, kvs: (b, 0, i, 0)),
                pl.BlockSpec((pl.Squeezed(), H, kv_tile, Dh),
                             lambda b, i, j, kvs: (b, 0, kvs[i] + j, 0)),
                pl.BlockSpec((pl.Squeezed(), H, kv_tile, Dh),
                             lambda b, i, j, kvs: (b, 0, kvs[i] + j, 0)),
                const_spec(params["w_proj"]), const_spec(params["b_proj"]),
            ],
            out_specs=pl.BlockSpec((pl.Squeezed(), q_tile, C),
                                   lambda b, i, j, kvs: (b, i, 0)),
            scratch_shapes=[
                pltpu.VMEM((H, q_tile, 1), jnp.float32),    # running max
                pltpu.VMEM((H, q_tile, 1), jnp.float32),    # running denom
                pltpu.VMEM((H, q_tile, Dh), jnp.float32),   # output accumulator
                pltpu.VMEM((q_tile, C), jnp.float32),       # head-concat buffer
            ],
        ),
        compiler_params=cparams(("parallel", "parallel", "arbitrary")),
    )(kv_start, ada, x, q, k, v, params["w_proj"], params["b_proj"])

    # -------------------- kernel 3: streamed MLP + residual ----------------------
    out = pl.pallas_call(
        mlp_kernel,
        out_shape=jax.ShapeDtypeStruct((B, N, C), x.dtype),
        grid_spec=pltpu.PrefetchScalarGridSpec(
            num_scalar_prefetch=0,
            grid=(B, n_q_tiles, n_cm_tiles),
            in_specs=[
                pl.BlockSpec((pl.Squeezed(), 6, C), lambda b, i, j: (b, 0, 0)),
                pl.BlockSpec((pl.Squeezed(), q_tile, C), lambda b, i, j: (b, i, 0)),
                pl.BlockSpec((C, cm_tile), lambda b, i, j: (0, j)),      # w_fc1 chunk
                pl.BlockSpec((1, cm_tile), lambda b, i, j: (0, j)),      # b_fc1 chunk
                pl.BlockSpec((cm_tile, C), lambda b, i, j: (j, 0)),      # w_fc2 chunk
                const_spec(params["b_fc2"]),
            ],
            out_specs=pl.BlockSpec((pl.Squeezed(), q_tile, C),
                                   lambda b, i, j: (b, i, 0)),
            scratch_shapes=[
                pltpu.VMEM((q_tile, C), jnp.float32),       # modulated LN (reused per chunk)
                pltpu.VMEM((q_tile, C), jnp.float32),       # fc2 accumulator
            ],
        ),
        compiler_params=cparams(("parallel", "parallel", "arbitrary")),
    )(ada, x1, params["w_fc1"], params["b_fc1"], params["w_fc2"], params["b_fc2"])

    return out


# ---------------------------------------------------------------------------
# pure-JAX reference (matches the torch DiTBlock forward semantics)
# ---------------------------------------------------------------------------
def dit_block_ref(x, c, params, *, num_heads, window_size=None):
    B, N, C = x.shape
    H = num_heads
    Dh = C // H

    cs = c * jax.nn.sigmoid(c)
    ada = cs @ params["w_ada"] + params["b_ada"]
    sm, scm, gm, sp, scp, gp = jnp.split(ada, 6, axis=1)

    def modulate(y, shift, scale):
        return y * (1.0 + scale[:, None, :]) + shift[:, None, :]

    h = modulate(_layernorm(x), sm, scm)
    qkv = h @ params["w_qkv"] + params["b_qkv"]
    qkv = qkv.reshape(B, N, 3, H, Dh).transpose(2, 0, 3, 1, 4)
    q, k, v = qkv[0], qkv[1], qkv[2]                              # (B, H, N, Dh)
    s = jnp.einsum("bhnd,bhmd->bhnm", q, k) * (Dh ** -0.5)
    if window_size is not None:
        idx = jnp.arange(N)
        mask = jnp.abs(idx[:, None] - idx[None, :]) <= window_size // 2
        s = jnp.where(mask[None, None], s, -jnp.inf)
    p = jax.nn.softmax(s, axis=-1)
    p = jnp.where(jnp.isnan(p), 0.0, p)                           # torch.nan_to_num
    attn = jnp.einsum("bhnm,bhmd->bhnd", p, v).transpose(0, 2, 1, 3).reshape(B, N, C)
    attn = attn @ params["w_proj"] + params["b_proj"]
    x = x + gm[:, None, :] * attn

    h2 = modulate(_layernorm(x), sp, scp)
    h2 = _gelu_tanh(h2 @ params["w_fc1"] + params["b_fc1"])
    h2 = h2 @ params["w_fc2"] + params["b_fc2"]
    x = x + gp[:, None, :] * h2
    return x


# ---------------------------------------------------------------------------
if __name__ == "__main__":
    B, N, C = 2, 32, 64         # batch, tokens, hidden_size
    H = 4                       # num_heads  (Dh = 16)
    mlp_ratio = 4.0
    Cm = int(C * mlp_ratio)     # 256
    TQ = TK = 8                 # token tiles (exercise the flash grid + kv offsets)
    CM_TILE = 128               # exercise the streamed-MLP grid (2 chunks)

    key = jax.random.PRNGKey(0)
    keys = jax.random.split(key, 12)
    f32 = jnp.float32

    x = jax.random.normal(keys[0], (B, N, C), dtype=f32)
    c = jax.random.normal(keys[1], (B, C), dtype=f32)

    params = {
        "w_ada":  0.02 * jax.random.normal(keys[2], (C, 6 * C), dtype=f32),
        "b_ada":  0.01 * jax.random.normal(keys[3], (1, 6 * C), dtype=f32),
        "w_qkv":  0.02 * jax.random.normal(keys[4], (C, 3 * C), dtype=f32),
        "b_qkv":  0.01 * jax.random.normal(keys[5], (1, 3 * C), dtype=f32),
        "w_proj": 0.02 * jax.random.normal(keys[6], (C, C), dtype=f32),
        "b_proj": 0.01 * jax.random.normal(keys[7], (1, C), dtype=f32),
        "w_fc1":  0.02 * jax.random.normal(keys[8], (C, Cm), dtype=f32),
        "b_fc1":  0.01 * jax.random.normal(keys[9], (1, Cm), dtype=f32),
        "w_fc2":  0.02 * jax.random.normal(keys[10], (Cm, C), dtype=f32),
        "b_fc2":  0.01 * jax.random.normal(keys[11], (1, C), dtype=f32),
    }

    def run(xx, cc, pp, window):
        return jax.block_until_ready(
            dit_block_pallas(xx, cc, pp, num_heads=H, window_size=window,
                             q_tile=TQ, kv_tile=TK, cm_tile=CM_TILE))

    # 1) full attention (DiTBlock default), f32
    out_full = run(x, c, params, None)
    ref_full = jax.block_until_ready(
        dit_block_ref(x, c, params, num_heads=H, window_size=None))
    assert out_full.shape == (B, N, C)
    assert jnp.allclose(out_full, ref_full, atol=1e-3, rtol=1e-3), (
        float(jnp.max(jnp.abs(out_full - ref_full))))

    # 2) sliding-window (masked window) attention, f32 — exercises kv-start prefetch
    win = 5
    out_win = run(x, c, params, win)
    ref_win = jax.block_until_ready(
        dit_block_ref(x, c, params, num_heads=H, window_size=win))
    assert jnp.allclose(out_win, ref_win, atol=1e-3, rtol=1e-3), (
        float(jnp.max(jnp.abs(out_win - ref_win))))

    # 3) bf16 operands with f32 accumulation (perf path) -- loose sanity check
    bf16 = jnp.bfloat16
    params_bf = {kk: vv.astype(bf16) for kk, vv in params.items()}
    out_bf = run(x.astype(bf16), c.astype(bf16), params_bf, win)
    assert out_bf.dtype == bf16
    out_bf_f32 = out_bf.astype(f32)
    assert bool(jnp.all(jnp.isfinite(out_bf_f32)))
    assert float(jnp.max(jnp.abs(out_bf_f32 - ref_win))) < 0.25

    print("KERNEL_OK")
</pallas_src>

<mosaic_0001>
module attributes {stable_mosaic.version = 11 : i64} {
  func.func @qkv_kernel(%arg0: i32, %arg1: i32, %arg2: memref<1x8x64xf32, #tpu.memory_space<vmem>>, %arg3: memref<1x6x64xf32, #tpu.memory_space<vmem>>, %arg4: memref<64x192xf32, #tpu.memory_space<vmem>>, %arg5: memref<1x192xf32, #tpu.memory_space<vmem>>, %arg6: memref<1x4x8x16xf32, #tpu.memory_space<vmem>>, %arg7: memref<1x4x8x16xf32, #tpu.memory_space<vmem>>, %arg8: memref<1x4x8x16xf32, #tpu.memory_space<vmem>>) attributes {dimension_semantics = [#tpu.dimension_semantics<parallel>, #tpu.dimension_semantics<parallel>], iteration_bounds = array<i64: 2, 4>, scalar_prefetch = 0 : i64, scratch_operands = 0 : i64, tpu.core_type = #tpu.core_type<tc>, window_params = [{transform_indices = @transform_0, window_bounds = array<i64: 1, 8, 64>}, {transform_indices = @transform_1, window_bounds = array<i64: 1, 6, 64>}, {pipeline_mode = #tpu.pipeline_mode<synchronous>, transform_indices = @transform_2, window_bounds = array<i64: 64, 192>}, {pipeline_mode = #tpu.pipeline_mode<synchronous>, transform_indices = @transform_3, window_bounds = array<i64: 1, 192>}, {transform_indices = @transform_4, window_bounds = array<i64: 1, 4, 8, 16>}, {transform_indices = @transform_5, window_bounds = array<i64: 1, 4, 8, 16>}, {transform_indices = @transform_6, window_bounds = array<i64: 1, 4, 8, 16>}]} {
    %c0 = arith.constant 0 : index
    %c0_0 = arith.constant 0 : index
    %c0_1 = arith.constant 0 : index
    %0 = vector.load %arg2[%c0, %c0_0, %c0_1] : memref<1x8x64xf32, #tpu.memory_space<vmem>>, vector<1x8x64xf32>
    %1 = vector.shape_cast %0 : vector<1x8x64xf32> to vector<8x64xf32>
    %c0_2 = arith.constant 0 : index
    %c0_3 = arith.constant 0 : index
    %c0_4 = arith.constant 0 : index
    %2 = vector.load %arg3[%c0_2, %c0_3, %c0_4] : memref<1x6x64xf32, #tpu.memory_space<vmem>>, vector<1x6x64xf32>
    %3 = vector.shape_cast %2 : vector<1x6x64xf32> to vector<6x64xf32>
    %4 = vector.extract_strided_slice %3 {offsets = [0, 0], sizes = [1, 64], strides = [1, 1]} : vector<6x64xf32> to vector<1x64xf32>
    %5 = vector.extract_strided_slice %3 {offsets = [1, 0], sizes = [1, 64], strides = [1, 1]} : vector<6x64xf32> to vector<1x64xf32>
    %cst = arith.constant dense<0.000000e+00> : vector<8xf32>
    %6 = vector.multi_reduction <add>, %1, %cst [1] : vector<8x64xf32> to vector<8xf32>
    %7 = vector.shape_cast %6 : vector<8xf32> to vector<8x1xf32>
    %cst_5 = arith.constant 6.400000e+01 : f32
    %8 = vector.broadcast %cst_5 : f32 to vector<8x1xf32>
    %9 = arith.divf %7, %8 : vector<8x1xf32>
    %10 = vector.broadcast %9 : vector<8x1xf32> to vector<8x64xf32>
    %11 = arith.subf %1, %10 : vector<8x64xf32>
    %12 = arith.mulf %11, %11 : vector<8x64xf32>
    %cst_6 = arith.constant dense<0.000000e+00> : vector<8xf32>
    %13 = vector.multi_reduction <add>, %12, %cst_6 [1] : vector<8x64xf32> to vector<8xf32>
    %14 = vector.shape_cast %13 : vector<8xf32> to vector<8x1xf32>
    %cst_7 = arith.constant 6.400000e+01 : f32
    %15 = vector.broadcast %cst_7 : f32 to vector<8x1xf32>
    %16 = arith.divf %14, %15 : vector<8x1xf32>
    %17 = vector.broadcast %9 : vector<8x1xf32> to vector<8x64xf32>
    %18 = arith.subf %1, %17 : vector<8x64xf32>
    %cst_8 = arith.constant 9.99999997E-7 : f32
    %19 = vector.broadcast %cst_8 : f32 to vector<8x1xf32>
    %20 = arith.addf %16, %19 : vector<8x1xf32>
    %21 = math.rsqrt %20 : vector<8x1xf32>
    %22 = vector.broadcast %21 : vector<8x1xf32> to vector<8x64xf32>
    %23 = arith.mulf %18, %22 : vector<8x64xf32>
    %cst_9 = arith.constant 1.000000e+00 : f32
    %24 = vector.broadcast %cst_9 : f32 to vector<1x64xf32>
    %25 = arith.addf %24, %5 : vector<1x64xf32>
    %26 = vector.broadcast %25 : vector<1x64xf32> to vector<8x64xf32>
    %27 = arith.mulf %23, %26 : vector<8x64xf32>
    %28 = vector.broadcast %4 : vector<1x64xf32> to vector<8x64xf32>
    %29 = arith.addf %27, %28 : vector<8x64xf32>
    %c0_10 = arith.constant 0 : index
    %c0_11 = arith.constant 0 : index
    %30 = vector.load %arg4[%c0_10, %c0_11] : memref<64x192xf32, #tpu.memory_space<vmem>>, vector<64x192xf32>
    %cst_12 = arith.constant dense<0.000000e+00> : vector<8x192xf32>
    %31 = tpu.matmul %29, %30, %cst_12 {dimension_numbers = #tpu.dot_dimension_numbers<[1], [0], [0], [1], [0, 0, 1, 1], [], []>} : vector<8x64xf32>, vector<64x192xf32>, vector<8x192xf32> -> vector<8x192xf32>
    %c0_13 = arith.constant 0 : index
    %c0_14 = arith.constant 0 : index
    %32 = vector.load %arg5[%c0_13, %c0_14] : memref<1x192xf32, #tpu.memory_space<vmem>>, vector<1x192xf32>
    %33 = vector.broadcast %32 : vector<1x192xf32> to vector<8x192xf32>
    %34 = arith.addf %31, %33 : vector<8x192xf32>
    %35 = vector.extract_strided_slice %34 {offsets = [0, 0], sizes = [8, 16], strides = [1, 1]} : vector<8x192xf32> to vector<8x16xf32>
    %c0_15 = arith.constant 0 : index
    %c0_16 = arith.constant 0 : index
    %c0_17 = arith.constant 0 : index
    %c0_18 = arith.constant 0 : index
    %36 = vector.load %arg6[%c0_15, %c0_16, %c0_17, %c0_18] : memref<1x4x8x16xf32, #tpu.memory_space<vmem>>, vector<1x1x8x16xf32>
    %37 = vector.shape_cast %36 : vector<1x1x8x16xf32> to vector<8x16xf32>
    %38 = vector.shape_cast %35 : vector<8x16xf32> to vector<1x1x8x16xf32>
    tpu.vector_store %arg6[%c0_15, %c0_16, %c0_17, %c0_18], %38 {strides = array<i32>} : memref<1x4x8x16xf32, #tpu.memory_space<vmem>>, vector<1x1x8x16xf32>,
    %39 = vector.extract_strided_slice %34 {offsets = [0, 64], sizes = [8, 16], strides = [1, 1]} : vector<8x192xf32> to vector<8x16xf32>
    %c0_19 = arith.constant 0 : index
    %c0_20 = arith.constant 0 : index
    %c0_21 = arith.constant 0 : index
    %c0_22 = arith.constant 0 : index
    %40 = vector.load %arg7[%c0_19, %c0_20, %c0_21, %c0_22] : memref<1x4x8x16xf32, #tpu.memory_space<vmem>>, vector<1x1x8x16xf32>
    %41 = vector.shape_cast %40 : vector<1x1x8x16xf32> to vector<8x16xf32>
    %42 = vector.shape_cast %39 : vector<8x16xf32> to vector<1x1x8x16xf32>
    tpu.vector_store %arg7[%c0_19, %c0_20, %c0_21, %c0_22], %42 {strides = array<i32>} : memref<1x4x8x16xf32, #tpu.memory_space<vmem>>, vector<1x1x8x16xf32>,
    %43 = vector.extract_strided_slice %34 {offsets = [0, 128], sizes = [8, 16], strides = [1, 1]} : vector<8x192xf32> to vector<8x16xf32>
    %c0_23 = arith.constant 0 : index
    %c0_24 = arith.constant 0 : index
    %c0_25 = arith.constant 0 : index
    %c0_26 = arith.constant 0 : index
    %44 = vector.load %arg8[%c0_23, %c0_24, %c0_25, %c0_26] : memref<1x4x8x16xf32, #tpu.memory_space<vmem>>, vector<1x1x8x16xf32>
    %45 = vector.shape_cast %44 : vector<1x1x8x16xf32> to vector<8x16xf32>
    %46 = vector.shape_cast %43 : vector<8x16xf32> to vector<1x1x8x16xf32>
    tpu.vector_store %arg8[%c0_23, %c0_24, %c0_25, %c0_26], %46 {strides = array<i32>} : memref<1x4x8x16xf32, #tpu.memory_space<vmem>>, vector<1x1x8x16xf32>,
    %47 = vector.extract_strided_slice %34 {offsets = [0, 16], sizes = [8, 16], strides = [1, 1]} : vector<8x192xf32> to vector<8x16xf32>
    %c0_27 = arith.constant 0 : index
    %c1 = arith.constant 1 : index
    %c0_28 = arith.constant 0 : index
    %c0_29 = arith.constant 0 : index
    %48 = vector.load %arg6[%c0_27, %c1, %c0_28, %c0_29] : memref<1x4x8x16xf32, #tpu.memory_space<vmem>>, vector<1x1x8x16xf32>
    %49 = vector.shape_cast %48 : vector<1x1x8x16xf32> to vector<8x16xf32>
    %50 = vector.shape_cast %47 : vector<8x16xf32> to vector<1x1x8x16xf32>
    tpu.vector_store %arg6[%c0_27, %c1, %c0_28, %c0_29], %50 {strides = array<i32>} : memref<1x4x8x16xf32, #tpu.memory_space<vmem>>, vector<1x1x8x16xf32>,
    %51 = vector.extract_strided_slice %34 {offsets = [0, 80], sizes = [8, 16], strides = [1, 1]} : vector<8x192xf32> to vector<8x16xf32>
    %c0_30 = arith.constant 0 : index
    %c1_31 = arith.constant 1 : index
    %c0_32 = arith.constant 0 : index
    %c0_33 = arith.constant 0 : index
    %52 = vector.load %arg7[%c0_30, %c1_31, %c0_32, %c0_33] : memref<1x4x8x16xf32, #tpu.memory_space<vmem>>, vector<1x1x8x16xf32>
    %53 = vector.shape_cast %52 : vector<1x1x8x16xf32> to vector<8x16xf32>
    %54 = vector.shape_cast %51 : vector<8x16xf32> to vector<1x1x8x16xf32>
    tpu.vector_store %arg7[%c0_30, %c1_31, %c0_32, %c0_33], %54 {strides = array<i32>} : memref<1x4x8x16xf32, #tpu.memory_space<vmem>>, vector<1x1x8x16xf32>,
    %55 = vector.extract_strided_slice %34 {offsets = [0, 144], sizes = [8, 16], strides = [1, 1]} : vector<8x192xf32> to vector<8x16xf32>
    %c0_34 = arith.constant 0 : index
    %c1_35 = arith.constant 1 : index
    %c0_36 = arith.constant 0 : index
    %c0_37 = arith.constant 0 : index
    %56 = vector.load %arg8[%c0_34, %c1_35, %c0_36, %c0_37] : memref<1x4x8x16xf32, #tpu.memory_space<vmem>>, vector<1x1x8x16xf32>
    %57 = vector.shape_cast %56 : vector<1x1x8x16xf32> to vector<8x16xf32>
    %58 = vector.shape_cast %55 : vector<8x16xf32> to vector<1x1x8x16xf32>
    tpu.vector_store %arg8[%c0_34, %c1_35, %c0_36, %c0_37], %58 {strides = array<i32>} : memref<1x4x8x16xf32, #tpu.memory_space<vmem>>, vector<1x1x8x16xf32>,
    %59 = vector.extract_strided_slice %34 {offsets = [0, 32], sizes = [8, 16], strides = [1, 1]} : vector<8x192xf32> to vector<8x16xf32>
    %c0_38 = arith.constant 0 : index
    %c2 = arith.constant 2 : index
    %c0_39 = arith.constant 0 : index
    %c0_40 = arith.constant 0 : index
    %60 = vector.load %arg6[%c0_38, %c2, %c0_39, %c0_40] : memref<1x4x8x16xf32, #tpu.memory_space<vmem>>, vector<1x1x8x16xf32>
    %61 = vector.shape_cast %60 : vector<1x1x8x16xf32> to vector<8x16xf32>
    %62 = vector.shape_cast %59 : vector<8x16xf32> to vector<1x1x8x16xf32>
    tpu.vector_store %arg6[%c0_38, %c2, %c0_39, %c0_40], %62 {strides = array<i32>} : memref<1x4x8x16xf32, #tpu.memory_space<vmem>>, vector<1x1x8x16xf32>,
    %63 = vector.extract_strided_slice %34 {offsets = [0, 96], sizes = [8, 16], strides = [1, 1]} : vector<8x192xf32> to vector<8x16xf32>
    %c0_41 = arith.constant 0 : index
    %c2_42 = arith.constant 2 : index
    %c0_43 = arith.constant 0 : index
    %c0_44 = arith.constant 0 : index
    %64 = vector.load %arg7[%c0_41, %c2_42, %c0_43, %c0_44] : memref<1x4x8x16xf32, #tpu.memory_space<vmem>>, vector<1x1x8x16xf32>
    %65 = vector.shape_cast %64 : vector<1x1x8x16xf32> to vector<8x16xf32>
    %66 = vector.shape_cast %63 : vector<8x16xf32> to vector<1x1x8x16xf32>
    tpu.vector_store %arg7[%c0_41, %c2_42, %c0_43, %c0_44], %66 {strides = array<i32>} : memref<1x4x8x16xf32, #tpu.memory_space<vmem>>, vector<1x1x8x16xf32>,
    %67 = vector.extract_strided_slice %34 {offsets = [0, 160], sizes = [8, 16], strides = [1, 1]} : vector<8x192xf32> to vector<8x16xf32>
    %c0_45 = arith.constant 0 : index
    %c2_46 = arith.constant 2 : index
    %c0_47 = arith.constant 0 : index
    %c0_48 = arith.constant 0 : index
    %68 = vector.load %arg8[%c0_45, %c2_46, %c0_47, %c0_48] : memref<1x4x8x16xf32, #tpu.memory_space<vmem>>, vector<1x1x8x16xf32>
    %69 = vector.shape_cast %68 : vector<1x1x8x16xf32> to vector<8x16xf32>
    %70 = vector.shape_cast %67 : vector<8x16xf32> to vector<1x1x8x16xf32>
    tpu.vector_store %arg8[%c0_45, %c2_46, %c0_47, %c0_48], %70 {strides = array<i32>} : memref<1x4x8x16xf32, #tpu.memory_space<vmem>>, vector<1x1x8x16xf32>,
    %71 = vector.extract_strided_slice %34 {offsets = [0, 48], sizes = [8, 16], strides = [1, 1]} : vector<8x192xf32> to vector<8x16xf32>
    %c0_49 = arith.constant 0 : index
    %c3 = arith.constant 3 : index
    %c0_50 = arith.constant 0 : index
    %c0_51 = arith.constant 0 : index
    %72 = vector.load %arg6[%c0_49, %c3, %c0_50, %c0_51] : memref<1x4x8x16xf32, #tpu.memory_space<vmem>>, vector<1x1x8x16xf32>
    %73 = vector.shape_cast %72 : vector<1x1x8x16xf32> to vector<8x16xf32>
    %74 = vector.shape_cast %71 : vector<8x16xf32> to vector<1x1x8x16xf32>
    tpu.vector_store %arg6[%c0_49, %c3, %c0_50, %c0_51], %74 {strides = array<i32>} : memref<1x4x8x16xf32, #tpu.memory_space<vmem>>, vector<1x1x8x16xf32>,
    %75 = vector.extract_strided_slice %34 {offsets = [0, 112], sizes = [8, 16], strides = [1, 1]} : vector<8x192xf32> to vector<8x16xf32>
    %c0_52 = arith.constant 0 : index
    %c3_53 = arith.constant 3 : index
    %c0_54 = arith.constant 0 : index
    %c0_55 = arith.constant 0 : index
    %76 = vector.load %arg7[%c0_52, %c3_53, %c0_54, %c0_55] : memref<1x4x8x16xf32, #tpu.memory_space<vmem>>, vector<1x1x8x16xf32>
    %77 = vector.shape_cast %76 : vector<1x1x8x16xf32> to vector<8x16xf32>
    %78 = vector.shape_cast %75 : vector<8x16xf32> to vector<1x1x8x16xf32>
    tpu.vector_store %arg7[%c0_52, %c3_53, %c0_54, %c0_55], %78 {strides = array<i32>} : memref<1x4x8x16xf32, #tpu.memory_space<vmem>>, vector<1x1x8x16xf32>,
    %79 = vector.extract_strided_slice %34 {offsets = [0, 176], sizes = [8, 16], strides = [1, 1]} : vector<8x192xf32> to vector<8x16xf32>
    %c0_56 = arith.constant 0 : index
    %c3_57 = arith.constant 3 : index
    %c0_58 = arith.constant 0 : index
    %c0_59 = arith.constant 0 : index
    %80 = vector.load %arg8[%c0_56, %c3_57, %c0_58, %c0_59] : memref<1x4x8x16xf32, #tpu.memory_space<vmem>>, vector<1x1x8x16xf32>
    %81 = vector.shape_cast %80 : vector<1x1x8x16xf32> to vector<8x16xf32>
    %82 = vector.shape_cast %79 : vector<8x16xf32> to vector<1x1x8x16xf32>
    tpu.vector_store %arg8[%c0_56, %c3_57, %c0_58, %c0_59], %82 {strides = array<i32>} : memref<1x4x8x16xf32, #tpu.memory_space<vmem>>, vector<1x1x8x16xf32>,
    return
  }
  func.func @transform_0(%arg0: i32, %arg1: i32) -> (i32, i32, i32) {
    %c0_i32 = arith.constant 0 : i32
    %c0_i32_0 = arith.constant 0 : i32
    return %arg0, %arg1, %c0_i32 : i32, i32, i32
  }
  func.func @transform_1(%arg0: i32, %arg1: i32) -> (i32, i32, i32) {
    %c0_i32 = arith.constant 0 : i32
    %c0_i32_0 = arith.constant 0 : i32
    %c0_i32_1 = arith.constant 0 : i32
    return %arg0, %c0_i32, %c0_i32_0 : i32, i32, i32
  }
  func.func @transform_2(%arg0: i32, %arg1: i32) -> (i32, i32) {
    %c0_i32 = arith.constant 0 : i32
    %c0_i32_0 = arith.constant 0 : i32
    %c0_i32_1 = arith.constant 0 : i32
    return %c0_i32, %c0_i32_0 : i32, i32
  }
  func.func @transform_3(%arg0: i32, %arg1: i32) -> (i32, i32) {
    %c0_i32 = arith.constant 0 : i32
    %c0_i32_0 = arith.constant 0 : i32
    %c0_i32_1 = arith.constant 0 : i32
    return %c0_i32, %c0_i32_0 : i32, i32
  }
  func.func @transform_4(%arg0: i32, %arg1: i32) -> (i32, i32, i32, i32) {
    %c0_i32 = arith.constant 0 : i32
    %c0_i32_0 = arith.constant 0 : i32
    %c0_i32_1 = arith.constant 0 : i32
    return %arg0, %c0_i32, %arg1, %c0_i32_0 : i32, i32, i32, i32
  }
  func.func @transform_5(%arg0: i32, %arg1: i32) -> (i32, i32, i32, i32) {
    %c0_i32 = arith.constant 0 : i32
    %c0_i32_0 = arith.constant 0 : i32
    %c0_i32_1 = arith.constant 0 : i32
    return %arg0, %c0_i32, %arg1, %c0_i32_0 : i32, i32, i32, i32
  }
  func.func @transform_6(%arg0: i32, %arg1: i32) -> (i32, i32, i32, i32) {
    %c0_i32 = arith.constant 0 : i32
    %c0_i32_0 = arith.constant 0 : i32
    %c0_i32_1 = arith.constant 0 : i32
    return %arg0, %c0_i32, %arg1, %c0_i32_0 : i32, i32, i32, i32
  }
}

</mosaic_0001>

<llo_original>
// kernel: tpu_custom_call.1
$region0: #{tpu_custom_call.1}
  #allocation0 [shape = 'u32[]', space=smem, size = 0x4, offset = 0x4, fixed_abs, tag = 'smem constant byte address 0x4 - core index']
  #allocation1 [shape = 'u32[72,128]{1,0:T(1,128)}', space=vmem, size = 0x9000, scoped, tag = 'internal scratch']
  %s0 = inlined_call_operand.hbm [shape: f32[2,32,64], index: 0, kind: input, shape index: {}]
  %s1 = inlined_call_operand.vmem [shape: f32[2,6,64], index: 1, kind: input, shape index: {}]
  %s2 = inlined_call_operand.hbm [shape: f32[64,192], index: 2, kind: input, shape index: {}]
  %s3 = inlined_call_operand.vmem [shape: f32[1,192], index: 3, kind: input, shape index: {}]
  %s4 = inlined_call_operand.vmem [shape: f32[2,4,32,16], index: 4, kind: output, shape index: {0}]
  %s5 = inlined_call_operand.vmem [shape: f32[2,4,32,16], index: 5, kind: output, shape index: {1}]
  %s6 = inlined_call_operand.vmem [shape: f32[2,4,32,16], index: 6, kind: output, shape index: {2}]
  %7 = xla_tuple %s4, %s5, %s6
  %s8 = sld [smem:[#allocation0]]
  $region175: #{tpu_custom_call.1} parent=0
    _
  %s10 = ssub.s32 1, %s8
  %s11 = scalar_select 0, %s10, %s8
  $region1: #{tpu_custom_call.1} parent=0
    #allocation2 [shape = 'u8[8192]{0}', space=vmem, size = 0x2000, scoped, tag = 'input window, operand 0']
    #allocation3 [shape = 's32[2]{0}', space=sflag, size = 0x8, scoped, tag = 'scoped memory for tpu_custom_call.1']
    #allocation4 [shape = 'u8[65536]{0}', space=vmem, size = 0x10000, scoped, tag = 'input window, operand 2, single buffered']
    #allocation5 [shape = 's32[1]{0}', space=sflag, size = 0x4, scoped, tag = 'scoped memory for tpu_custom_call.1']
    #allocation6 [shape = 'u8[32768]{0}', space=vmem, size = 0x8000, scoped, tag = 'output window, operand 0']
    #allocation7 [shape = 'u8[32768]{0}', space=vmem, size = 0x8000, scoped, tag = 'output window, operand 1']
    #allocation8 [shape = 'u8[32768]{0}', space=vmem, size = 0x8000, scoped, tag = 'output window, operand 2']
    %12 = vsyncpa [#allocation3], 0
    %s13 = scalar_lea.sflag [#allocation3], 1
    %14 = vsyncpa %s13, 0
    %15 = vsyncpa [#allocation5], 0
    loop: start=0, step=1, limit=10
    $region2: #{tpu_custom_call.1} parent=1 // loop_pre_header
      _
    $region3: #{tpu_custom_call.1} parent=1 // loop_header
      %s17 = sphi 0, %s21
      %p18 = scmp.ge.s32.totalorder %s17, 10
      %s24 = sphi 0, %s36
      %s25 = sphi 0, %s32
      %s26 = sphi 0, %s24
      %s27 = sphi 0, %s25
      %s28 = sphi 0, %s26
      %s29 = sphi 0, %s27
      %s41 = sphi 0, %s43
      %s44 = sphi 0, %s41
      %s45 = sphi 0, %s44
      %s61 = sphi 0, %s45
      %s67 = sphi 0, %s69
      %s70 = sphi 0, %s67
      %s71 = sphi 0, %s70
      %s87 = sphi 0, %s71
      %s91 = sphi 0, %s91
      %s93 = sphi 0, %s91
      %s94 = sphi 0, %s93
      %s108 = sphi 0, %s94
      %s112 = sphi 0, %s112
      %s114 = sphi 0, %s112
      %s115 = sphi 0, %s114
      %s129 = sphi 0, %s115
      %s137 = sphi 0, %s139
      %s140 = sphi 0, %s137
      %s141 = sphi 0, %s140
      %s157 = sphi 0, %s141
      %s165 = sphi 0, %s167
      %s168 = sphi 0, %s165
      %s169 = sphi 0, %s168
      %s185 = sphi 0, %s169
      %s193 = sphi 0, %s195
      %s196 = sphi 0, %s193
      %s197 = sphi 0, %s196
      %s213 = sphi 0, %s197
    $region4: #{tpu_custom_call.1} parent=1 // loop_header_branch
      %20 = sbr.rel (%p18) target = $region8
    $region5: #{tpu_custom_call.1} parent=1 // loop_body
      %s22 = ssub.s32 %s17, 1
      %s23 = ssub.s32 %s17, 2
      %s30 = sadd.s32 1, %s25
      %p31 = scmp.ge.s32.totalorder %s30, 4
      %s32 = scalar_select %p31, 0, %s30
      %s33 = sadd.s32 1, %s24
      %s34 = scalar_select %p31, %s33, %s24
      %p35 = scmp.ge.s32.totalorder %s34, 2
      %s36 = scalar_select %p35, 0, %s34
      %s37 = ssub.s32 %s24, %s36
      %s38 = ssub.s32 %s25, %s32
      %s39 = sor.u32 %s37, %s38
      %p40 = scmp.eq.s32.totalorder %s39, 0
      %s42 = sadd.s32 %s41, 1
      %s43 = scalar_select %p40, %s41, %s42
      %p46 = pneg %p40
      %p47 = scmp.eq.s32.totalorder %s17, 7
      %p48 = por %p46, %p47
      %p49 = scmp.ne.s32.totalorder %s41, %s44
      %p50 = scmp.eq.s32.totalorder %s17, 0
      %p51 = por %p49, %p50
      %p52 = scmp.ne.s32.totalorder %s41, %s44
      %p53 = scmp.eq.s32.totalorder %s22, 7
      %p54 = por %p52, %p53
      %p55 = scmp.ne.s32.totalorder %s44, %s45
      %p56 = scmp.eq.s32.totalorder %s22, 0
      %p57 = por %p55, %p56
      %p58 = scmp.ne.s32.totalorder %s44, %s45
      %p59 = scmp.eq.s32.totalorder %s23, 7
      %p60 = por %p58, %p59
      %p62 = scmp.ne.s32.totalorder %s45, %s61
      %p63 = scmp.eq.s32.totalorder %s23, 0
      %p64 = por %p62, %p63
      %s65 = ssub.s32 %s24, %s36
      %p66 = scmp.eq.s32.totalorder %s65, 0
      %s68 = sadd.s32 %s67, 1
      %s69 = scalar_select %p66, %s67, %s68
      %p72 = pneg %p66
      %p73 = scmp.eq.s32.totalorder %s17, 7
      %p74 = por %p72, %p73
      %p75 = scmp.ne.s32.totalorder %s67, %s70
      %p76 = scmp.eq.s32.totalorder %s17, 0
      %p77 = por %p75, %p76
      %p78 = scmp.ne.s32.totalorder %s67, %s70
      %p79 = scmp.eq.s32.totalorder %s22, 7
      %p80 = por %p78, %p79
      %p81 = scmp.ne.s32.totalorder %s70, %s71
      %p82 = scmp.eq.s32.totalorder %s22, 0
      %p83 = por %p81, %p82
      %p84 = scmp.ne.s32.totalorder %s70, %s71
      %p85 = scmp.eq.s32.totalorder %s23, 7
      %p86 = por %p84, %p85
      %p88 = scmp.ne.s32.totalorder %s71, %s87
      %p89 = scmp.eq.s32.totalorder %s23, 0
      %p90 = por %p88, %p89
      %s92 = sadd.s32 %s91, 1
      %p95 = scmp.eq.s32.totalorder %s17, 7
      %p96 = scmp.ne.s32.totalorder %s91, %s93
      %p97 = scmp.eq.s32.totalorder %s17, 0
      %p98 = por %p96, %p97
      %p99 = scmp.ne.s32.totalorder %s91, %s93
      %p100 = scmp.eq.s32.totalorder %s22, 7
      %p101 = por %p99, %p100
      %p102 = scmp.ne.s32.totalorder %s93, %s94
      %p103 = scmp.eq.s32.totalorder %s22, 0
      %p104 = por %p102, %p103
      %p105 = scmp.ne.s32.totalorder %s93, %s94
      %p106 = scmp.eq.s32.totalorder %s23, 7
      %p107 = por %p105, %p106
      %p109 = scmp.ne.s32.totalorder %s94, %s108
      %p110 = scmp.eq.s32.totalorder %s23, 0
      %p111 = por %p109, %p110
      %s113 = sadd.s32 %s112, 1
      %p116 = scmp.eq.s32.totalorder %s17, 7
      %p117 = scmp.ne.s32.totalorder %s112, %s114
      %p118 = scmp.eq.s32.totalorder %s17, 0
      %p119 = por %p117, %p118
      %p120 = scmp.ne.s32.totalorder %s112, %s114
      %p121 = scmp.eq.s32.totalorder %s22, 7
      %p122 = por %p120, %p121
      %p123 = scmp.ne.s32.totalorder %s114, %s115
      %p124 = scmp.eq.s32.totalorder %s22, 0
      %p125 = por %p123, %p124
      %p126 = scmp.ne.s32.totalorder %s114, %s115
      %p127 = scmp.eq.s32.totalorder %s23, 7
      %p128 = por %p126, %p127
      %p130 = scmp.ne.s32.totalorder %s115, %s129
      %p131 = scmp.eq.s32.totalorder %s23, 0
      %p132 = por %p130, %p131
      %s133 = ssub.s32 %s24, %s36
      %s134 = ssub.s32 %s25, %s32
      %s135 = sor.u32 %s133, %s134
      %p136 = scmp.eq.s32.totalorder %s135, 0
      %s138 = sadd.s32 %s137, 1
      %s139 = scalar_select %p136, %s137, %s138
      %p142 = pneg %p136
      %p143 = scmp.eq.s32.totalorder %s17, 7
      %p144 = por %p142, %p143
      %p145 = scmp.ne.s32.totalorder %s137, %s140
      %p146 = scmp.eq.s32.totalorder %s17, 0
      %p147 = por %p145, %p146
      %p148 = scmp.ne.s32.totalorder %s137, %s140
      %p149 = scmp.eq.s32.totalorder %s22, 7
      %p150 = por %p148, %p149
      %p151 = scmp.ne.s32.totalorder %s140, %s141
      %p152 = scmp.eq.s32.totalorder %s22, 0
      %p153 = por %p151, %p152
      %p154 = scmp.ne.s32.totalorder %s140, %s141
      %p155 = scmp.eq.s32.totalorder %s23, 7
      %p156 = por %p154, %p155
      %p158 = scmp.ne.s32.totalorder %s141, %s157
      %p159 = scmp.eq.s32.totalorder %s23, 0
      %p160 = por %p158, %p159
      %s161 = ssub.s32 %s24, %s36
      %s162 = ssub.s32 %s25, %s32
      %s163 = sor.u32 %s161, %s162
      %p164 = scmp.eq.s32.totalorder %s163, 0
      %s166 = sadd.s32 %s165, 1
      %s167 = scalar_select %p164, %s165, %s166
      %p170 = pneg %p164
      %p171 = scmp.eq.s32.totalorder %s17, 7
      %p172 = por %p170, %p171
      %p173 = scmp.ne.s32.totalorder %s165, %s168
      %p174 = scmp.eq.s32.totalorder %s17, 0
      %p175 = por %p173, %p174
      %p176 = scmp.ne.s32.totalorder %s165, %s168
      %p177 = scmp.eq.s32.totalorder %s22, 7
      %p178 = por %p176, %p177
      %p179 = scmp.ne.s32.totalorder %s168, %s169
      %p180 = scmp.eq.s32.totalorder %s22, 0
      %p181 = por %p179, %p180
      %p182 = scmp.ne.s32.totalorder %s168, %s169
      %p183 = scmp.eq.s32.totalorder %s23, 7
      %p184 = por %p182, %p183
      %p186 = scmp.ne.s32.totalorder %s169, %s185
      %p187 = scmp.eq.s32.totalorder %s23, 0
      %p188 = por %p186, %p187
      %s189 = ssub.s32 %s24, %s36
      %s190 = ssub.s32 %s25, %s32
      %s191 = sor.u32 %s189, %s190
      %p192 = scmp.eq.s32.totalorder %s191, 0
      %s194 = sadd.s32 %s193, 1
      %s195 = scalar_select %p192, %s193, %s194
      %p198 = pneg %p192
      %p199 = scmp.eq.s32.totalorder %s17, 7
      %p200 = por %p198, %p199
      %p201 = scmp.ne.s32.totalorder %s193, %s196
      %p202 = scmp.eq.s32.totalorder %s17, 0
      %p203 = por %p201, %p202
      %p204 = scmp.ne.s32.totalorder %s193, %s196
      %p205 = scmp.eq.s32.totalorder %s22, 7
      %p206 = por %p204, %p205
      %p207 = scmp.ne.s32.totalorder %s196, %s197
      %p208 = scmp.eq.s32.totalorder %s22, 0
      %p209 = por %p207, %p208
      %p210 = scmp.ne.s32.totalorder %s196, %s197
      %p211 = scmp.eq.s32.totalorder %s23, 7
      %p212 = por %p210, %p211
      %p214 = scmp.ne.s32.totalorder %s197, %s213
      %p215 = scmp.eq.s32.totalorder %s23, 0
      %p216 = por %p214, %p215
      %p217 = scmp.le.s32.totalorder 1, %s17
      %p218 = scmp.lt.s32.totalorder %s17, 9
      %p219 = pnand %p217, %p218
      %p220 = pneg %p219
      // Predicated region
      $region9: #{tpu_custom_call.1} parent=5 // pred_check
        _
      $region10: #{tpu_custom_call.1} parent=5 // pred_check_branch
        %222 = sbr.rel (%p219) target = $region12
      $region11: #{tpu_custom_call.1} parent=5 // pred_region
        %s223 = ssub.s32 %s17, 1
        // Predicated region
        $region13: #{tpu_custom_call.1} parent=11 // pred_check
          %p224 = pneg %p104
        $region14: #{tpu_custom_call.1} parent=11 // pred_check_branch
          %226 = sbr.rel (%p224) target = $region16
        $region15: #{tpu_custom_call.1} parent=11 // pred_region
          %228 = vsyncadd [#allocation5], 0
          %s229 = sshll.u32 %s2, 4
          %s230 = int_to_ptr.hbm [resolvable:$true] %s229
          %s231 = sshll.u32 [#allocation4], 4
          %s232 = int_to_ptr.vmem [resolvable:$true] %s231
          %237 = dma.hbm_to_vmem [thread:$0]  %s230, 2048, %s232, [#allocation5], 256, 256, 16
        $region16: #{tpu_custom_call.1} parent=11 // pred_fallthru
          _
        // Predicated region
        $region17: #{tpu_custom_call.1} parent=11 // pred_check
          %p238 = pneg %p125
        $region18: #{tpu_custom_call.1} parent=11 // pred_check_branch
          %240 = sbr.rel (%p238) target = $region20
        $region19: #{tpu_custom_call.1} parent=11 // pred_region
          _
        $region20: #{tpu_custom_call.1} parent=11 // pred_fallthru
          _
      $region12: #{tpu_custom_call.1} parent=5 // pred_fallthru
        _
      %p241 = scmp.lt.s32.totalorder %s17, 8
      // Predicated region
      $region21: #{tpu_custom_call.1} parent=5 // pred_check
        %p242 = pneg %p241
      $region22: #{tpu_custom_call.1} parent=5 // pred_check_branch
        %244 = sbr.rel (%p242) target = $region24
      $region23: #{tpu_custom_call.1} parent=5 // pred_region
        // Predicated region
        $region25: #{tpu_custom_call.1} parent=23 // pred_check
          %p245 = pneg %p51
        $region26: #{tpu_custom_call.1} parent=23 // pred_check_branch
          %247 = sbr.rel (%p245) target = $region28
        $region27: #{tpu_custom_call.1} parent=23 // pred_region
          %s248 = sand.u32 %s41, 1
          %s249 = scalar_lea.sflag [#allocation3], %s248
          %s250 = sand.u32 %s41, 1
          %s251 = smul.addr %s250, 8
          %s252 = scalar_lea.vmem [#allocation2], %s251
          %254 = vsyncadd %s249, 0
          %s255 = smul.addr %s24, 4
          %s256 = sadd.s32 %s25, %s255
          %s257 = smul.addr %s256, 8
          %s258 = scalar_lea.hbm %s0, %s257
          %s260 = sshll.u32 %s258, 4
          %s261 = int_to_ptr.hbm [resolvable:$true] %s260
          %s262 = sshll.u32 %s252, 4
          %s263 = int_to_ptr.vmem [resolvable:$true] %s262
          %265 = dma.hbm_to_vmem [thread:$0]  %s261, 128, %s263, %s249
        $region28: #{tpu_custom_call.1} parent=23 // pred_fallthru
          _
        // Predicated region
        $region29: #{tpu_custom_call.1} parent=23 // pred_check
          %p266 = pneg %p77
        $region30: #{tpu_custom_call.1} parent=23 // pred_check_branch
          %268 = sbr.rel (%p266) target = $region32
        $region31: #{tpu_custom_call.1} parent=23 // pred_region
          %p269 = scmp.lt.s32.totalorder %s24, 1
          %s270 = scalar_select %p269, %s24, 1
          %s271 = smul.addr %s270, 8
          %s272 = scalar_lea.vmem %s1, %s271
        $region32: #{tpu_custom_call.1} parent=23 // pred_fallthru
          _
      $region24: #{tpu_custom_call.1} parent=5 // pred_fallthru
        _
      %p273 = scmp.le.s32.totalorder 1, %s17
      %p274 = scmp.lt.s32.totalorder %s17, 9
      %p275 = pnand %p273, %p274
      %p276 = pneg %p275
      // Predicated region
      $region33: #{tpu_custom_call.1} parent=5 // pred_check
        _
      $region34: #{tpu_custom_call.1} parent=5 // pred_check_branch
        %278 = sbr.rel (%p275) target = $region36
      $region35: #{tpu_custom_call.1} parent=5 // pred_region
        %s279 = ssub.s32 %s17, 1
        %s280 = sand.u32 %s44, 1
        %s281 = scalar_lea.sflag [#allocation3], %s280
        %s282 = sand.u32 %s44, 1
        %s283 = smul.addr %s282, 8
        %s284 = scalar_lea.vmem [#allocation2], %s283
        // Predicated region
        $region37: #{tpu_custom_call.1} parent=35 // pred_check
          %p285 = pneg %p57
        $region38: #{tpu_custom_call.1} parent=35 // pred_check_branch
          %287 = sbr.rel (%p285) target = $region40
        $region39: #{tpu_custom_call.1} parent=35 // pred_region
          %289 = dma.done %s281, 128
        $region40: #{tpu_custom_call.1} parent=35 // pred_fallthru
          _
        // Predicated region
        $region41: #{tpu_custom_call.1} parent=35 // pred_check
          %p290 = pneg %p104
        $region42: #{tpu_custom_call.1} parent=35 // pred_check_branch
          %292 = sbr.rel (%p290) target = $region44
        $region43: #{tpu_custom_call.1} parent=35 // pred_region
          %294 = dma.done [#allocation5], 2048
        $region44: #{tpu_custom_call.1} parent=35 // pred_fallthru
          _
        %s295 = sand.u32 %s44, 1
        %s296 = scalar_lea.sflag [#allocation3], %s295
        %s297 = sand.u32 %s44, 1
        %s298 = smul.addr %s297, 8
        %s299 = scalar_lea.vmem [#allocation2], %s298
        %p300 = pneg %p57
        %p301 = pneg %p54
        %p302 = scmp.lt.s32.totalorder %s26, 1
        %s303 = scalar_select %p302, %s26, 1
        %s304 = smul.addr %s303, 8
        %s305 = scalar_lea.vmem %s1, %s304
        %p306 = pneg %p83
        %p307 = pneg %p80
        %p308 = pneg %p104
        %p309 = pneg %p101
        %p310 = pneg %p125
        %p311 = pneg %p122
        %p312 = pneg %p153
        %p313 = pneg %p150
        %s314 = sand.u32 %s140, 1
        %s315 = sand.u32 %s140, 1
        %s316 = smul.addr %s315, 32
        %s317 = scalar_lea.vmem [#allocation6], %s316
        %p318 = pneg %p181
        %p319 = pneg %p178
        %s320 = sand.u32 %s168, 1
        %s321 = sand.u32 %s168, 1
        %s322 = smul.addr %s321, 32
        %s323 = scalar_lea.vmem [#allocation7], %s322
        %p324 = pneg %p209
        %p325 = pneg %p206
        %s326 = sand.u32 %s196, 1
        %s327 = sand.u32 %s196, 1
        %s328 = smul.addr %s327, 32
        %s329 = scalar_lea.vmem [#allocation8], %s328
        %p330 = scmp.lt.s32.totalorder %s26, 1
        %s331 = scalar_select %p330, %s26, 1
        %s332 = smul.addr %s331, 8
        %s333 = scalar_lea.vmem %s1, %s332
        %v334 = vld [vmem:[%s284] sm:$0xff]
        %v335 = vld [vmem:[%s333] sm:$0x3f]
        %vm336 = vcmask 523264
        %v337 = vsel %vm336, %v334, 0.0
        %338 = vadd.xlane.f32.xlu0 %v337
        %v339 = vpop.xlane.xlu0 %338
        %v340 = vrcp.pop 64.0
        %v341 = vmul.f32 64.0, %v340
        %v342 = vsub.f32 1.0, %v341
        %v343 = vmul.f32 %v340, %v342
        %v344 = vadd.f32 %v340, %v343
        %vm345 = vweird.f32 %v340
        %v346 = vsel %vm345, %v340, %v344
        %v347 = vmul.f32 %v339, %v346
        %v348 = vsub.f32 %v334, %v347
        %v349 = vmul.f32 %v348, %v348
        %v350 = vsel %vm336, %v349, 0.0
        %351 = vadd.xlane.f32.xlu0 %v350
        %v352 = vpop.xlane.xlu0 %351
        %v353 = vmul.f32 %v352, %v346
        %v354 = vadd.f32 %v353, 1e-06
        %v355 = vrsqrt.pop %v354
        %v356 = vmul.f32 %v355, %v354
        %v357 = vmul.f32 %v356, %v355
        %v358 = vmul.f32 0.5, %v357
        %v359 = vsub.f32 1.5, %v358
        %v360 = vmul.f32 %v355, %v359
        %vm361 = vweird.f32 %v354
        %vm362 = vweird.f32 %v355
        %vm363 = vmor %vm361, %vm362
        %v364 = vsel %vm363, %v355, %v360
        %v365 = vmul.f32 %v348, %v364
        %v366 = vadd.f32 %v335, 1.0
        %v367 = vperm.slane %v366, 1
        %v368 = vmul.f32 %v365, %v367
        %v369 = vperm.slane %v335, 0
        %v370 = vadd.f32 %v368, %v369
        %v371 = vld [vmem:[#allocation4] sm:$0xff]
        %v372 = vld [vmem:[#allocation4 + $0x8] sm:$0xff]
        %v373 = vld [vmem:[#allocation4 + $0x10] sm:$0xff]
        %v374 = vld [vmem:[#allocation4 + $0x18] sm:$0xff]
        %v375 = vld [vmem:[#allocation4 + $0x20] sm:$0xff]
        %v376 = vld [vmem:[#allocation4 + $0x28] sm:$0xff]
        %v377 = vld [vmem:[#allocation4 + $0x30] sm:$0xff]
        %v378 = vld [vmem:[#allocation4 + $0x38] sm:$0xff]
        %v379 = vld [vmem:[#allocation4 + $0x40] sm:$0xff]
        %v380 = vld [vmem:[#allocation4 + $0x48] sm:$0xff]
        %v381 = vld [vmem:[#allocation4 + $0x50] sm:$0xff]
        %v382 = vld [vmem:[#allocation4 + $0x58] sm:$0xff]
        %v383 = vld [vmem:[#allocation4 + $0x60] sm:$0xff]
        %v384 = vld [vmem:[#allocation4 + $0x68] sm:$0xff]
        %v385 = vld [vmem:[#allocation4 + $0x70] sm:$0xff]
        %v386 = vld [vmem:[#allocation4 + $0x78] sm:$0xff]
        %v387 = vld [vmem:[%s3] sm:$0x3]
        %v389 = vperm.slane %v387, 0
        %v390 = vperm.slane %v387, 1
        %v394 = vsel %vm336, %v370, 0
        %396 = vmatpush.msra.mxu0 0.0
        %397 = vmatpush.msra.mxu0 0.0
        %398 = vmatpush.msra.mxu0 0.0
        %399 = vmatpush.msra.mxu0 0.0
        %400 = vmatpush.msra.mxu0 0.0
        %401 = vmatpush.msra.mxu0 0.0
        %402 = vmatpush.msra.mxu0 0.0
        %403 = vmatpush.msra.mxu0 0.0
        %404 = vmatpush.msra.mxu0 %v385
        %405 = vmatpush.msra.mxu0 %v383
        %406 = vmatpush.msra.mxu0 %v381
        %407 = vmatpush.msra.mxu0 %v379
        %408 = vmatpush.msra.mxu0 %v377
        %409 = vmatpush.msra.mxu0 %v375
        %410 = vmatpush.msra.mxu0 %v373
        %411 = vmatpush.msra.mxu0 %v371
        %412 = vmatmul.f32.gmra.mxu0 %v394
        %v413 = vpop.f32.mrf.mxu0
        %v414 = vadd.f32 %v389, %v413
        %415 = vdwg.mxu0
        %416 = vmatpush.msra.mxu0 0.0
        %417 = vmatpush.msra.mxu0 0.0
        %418 = vmatpush.msra.mxu0 0.0
        %419 = vmatpush.msra.mxu0 0.0
        %420 = vmatpush.msra.mxu0 0.0
        %421 = vmatpush.msra.mxu0 0.0
        %422 = vmatpush.msra.mxu0 0.0
        %423 = vmatpush.msra.mxu0 0.0
        %424 = vmatpush.msra.mxu0 %v386
        %425 = vmatpush.msra.mxu0 %v384
        %426 = vmatpush.msra.mxu0 %v382
        %427 = vmatpush.msra.mxu0 %v380
        %428 = vmatpush.msra.mxu0 %v378
        %429 = vmatpush.msra.mxu0 %v376
        %430 = vmatpush.msra.mxu0 %v374
        %431 = vmatpush.msra.mxu0 %v372
        %432 = vmatmul.f32.gmra.mxu0 %v394
        %v433 = vpop.f32.mrf.mxu0
        %v434 = vadd.f32 %v390, %v433
        %435 = vdwg.mxu0
        %vm436 = vcmask 130048
        %437 = vst.msk [vmem:[%s317] sm:$0xff] %vm436, %v414
        %439 = vrot.lane.b32.xlu0 %v414, 64
        %v440 = vpop.permute.xlu0 %439
        %442 = vst.msk [vmem:[%s323] sm:$0xff] %vm436, %v440
        %443 = vst.msk [vmem:[%s329] sm:$0xff] %vm436, %v434
        %444 = vrot.lane.b32.xlu0 %v414, 112
        %v445 = vpop.permute.xlu0 %444
        %s447 = scalar_lea.vmem %s317, 8 [#allocation6]
        %448 = vst.msk [vmem:[%s447] sm:$0xff] %vm436, %v445
        %449 = vrot.lane.b32.xlu0 %v414, 48
        %v450 = vpop.permute.xlu0 %449
        %s452 = scalar_lea.vmem %s323, 8 [#allocation7]
        %453 = vst.msk [vmem:[%s452] sm:$0xff] %vm436, %v450
        %455 = vrot.lane.b32.xlu0 %v434, 112
        %v456 = vpop.permute.xlu0 %455
        %s458 = scalar_lea.vmem %s329, 8 [#allocation8]
        %459 = vst.msk [vmem:[%s458] sm:$0xff] %vm436, %v456
        %460 = vrot.lane.b32.xlu0 %v414, 96
        %v461 = vpop.permute.xlu0 %460
        %s463 = scalar_lea.vmem %s317, 16 [#allocation6]
        %464 = vst.msk [vmem:[%s463] sm:$0xff] %vm436, %v461
        %465 = vrot.lane.b32.xlu0 %v414, 32
        %v466 = vpop.permute.xlu0 %465
        %s468 = scalar_lea.vmem %s323, 16 [#allocation7]
        %469 = vst.msk [vmem:[%s468] sm:$0xff] %vm436, %v466
        %470 = vrot.lane.b32.xlu0 %v434, 96
        %v471 = vpop.permute.xlu0 %470
        %s473 = scalar_lea.vmem %s329, 16 [#allocation8]
        %474 = vst.msk [vmem:[%s473] sm:$0xff] %vm436, %v471
        %475 = vrot.lane.b32.xlu0 %v414, 80
        %v476 = vpop.permute.xlu0 %475
        %s478 = scalar_lea.vmem %s317, 24 [#allocation6]
        %479 = vst.msk [vmem:[%s478] sm:$0xff] %vm436, %v476
        %480 = vrot.lane.b32.xlu0 %v414, 16
        %v481 = vpop.permute.xlu0 %480
        %s483 = scalar_lea.vmem %s323, 24 [#allocation7]
        %484 = vst.msk [vmem:[%s483] sm:$0xff] %vm436, %v481
        %485 = vrot.lane.b32.xlu0 %v434, 80
        %v486 = vpop.permute.xlu0 %485
        %s488 = scalar_lea.vmem %s329, 24 [#allocation8]
        %489 = vst.msk [vmem:[%s488] sm:$0xff] %vm436, %v486
        %s490 = sand.u32 %s140, 1
        %s491 = sand.u32 %s140, 1
        %s492 = smul.addr %s491, 32
        %s493 = scalar_lea.vmem [#allocation6], %s492
        %s494 = sand.u32 %s168, 1
        %s495 = sand.u32 %s168, 1
        %s496 = smul.addr %s495, 32
        %s497 = scalar_lea.vmem [#allocation7], %s496
        %s498 = sand.u32 %s196, 1
        %s499 = sand.u32 %s196, 1
        %s500 = smul.addr %s499, 32
        %s501 = scalar_lea.vmem [#allocation8], %s500
        // Predicated region
        $region45: #{tpu_custom_call.1} parent=35 // pred_check
          %p502 = pneg %p150
        $region46: #{tpu_custom_call.1} parent=35 // pred_check_branch
          %504 = sbr.rel (%p502) target = $region48
        $region47: #{tpu_custom_call.1} parent=35 // pred_region
          %s505 = smul.addr %s26, 16
          %s506 = sadd.s32 %s27, %s505
          %s507 = smul.addr %s506, 8
          %s508 = scalar_lea.vmem %s4, %s507
          // Predicated region
          $region49: #{tpu_custom_call.1} parent=47 // pred_check
            _
          $region50: #{tpu_custom_call.1} parent=47 // pred_check_branch
            %510 = sbr.rel (0) target = $region52
          $region51: #{tpu_custom_call.1} parent=47 // pred_region
            // Predicated region
            $region53: #{tpu_custom_call.1} parent=51 // pred_check
              _
            $region54: #{tpu_custom_call.1} parent=51 // pred_check_branch
              %512 = sbr.rel (0) target = $region56
            $region55: #{tpu_custom_call.1} parent=51 // pred_region
              // Predicated region
              $region68: #{tpu_custom_call.1} parent=55 // pred_check
                _
              $region69: #{tpu_custom_call.1} parent=55 // pred_check_branch
                %534 = sbr.rel (0) target = $region71
              $region70: #{tpu_custom_call.1} parent=55 // pred_region
                loop: start=0, step=1, limit=1
                $region72: #{tpu_custom_call.1} parent=70 // loop_pre_header
                  _
                $region73: #{tpu_custom_call.1} parent=70 // loop_header
                  %s536 = sphi 0, %s540
                  %p537 = scmp.ge.s32.totalorder %s536, 1
                  %s541 = sphi %s493, %s493
                  %s542 = sphi %s508, %s508
                $region74: #{tpu_custom_call.1} parent=70 // loop_header_branch
                  %539 = sbr.rel (%p537) target = $region78
                $region75: #{tpu_custom_call.1} parent=70 // loop_body
                  %v543 = vld [vmem:[%s541] sm:$0xff]
                  %544 = vst [vmem:[%s542] sm:$0xff] %v543
                  %v545 = vld [vmem:[%s541 + $0x8] sm:$0xff]
                  %546 = vst [vmem:[%s542 + $0x20] sm:$0xff] %v545
                  %v547 = vld [vmem:[%s541 + $0x10] sm:$0xff]
                  %548 = vst [vmem:[%s542 + $0x40] sm:$0xff] %v547
                  %v549 = vld [vmem:[%s541 + $0x18] sm:$0xff]
                  %550 = vst [vmem:[%s542 + $0x60] sm:$0xff] %v549
                $region76: #{tpu_custom_call.1} parent=70 // loop_footer
                  %s540 = sadd.s32 1, %s536
                $region77: #{tpu_custom_call.1} parent=70 // loop_footer_branch
                  %535 = sbr.rel target = $region73
                $region78: #{tpu_custom_call.1} parent=70 // loop_exit
                  _
              $region71: #{tpu_custom_call.1} parent=55 // pred_fallthru
                _
              // Predicated region
              $region79: #{tpu_custom_call.1} parent=55 // pred_check
                _
              $region80: #{tpu_custom_call.1} parent=55 // pred_check_branch
                %552 = sbr.rel target = $region82
              $region81: #{tpu_custom_call.1} parent=55 // pred_region
                _
              $region82: #{tpu_custom_call.1} parent=55 // pred_fallthru
                _
            $region56: #{tpu_custom_call.1} parent=51 // pred_fallthru
              _
            // Predicated region
            $region57: #{tpu_custom_call.1} parent=51 // pred_check
              _
            $region58: #{tpu_custom_call.1} parent=51 // pred_check_branch
              %514 = sbr.rel target = $region60
            $region59: #{tpu_custom_call.1} parent=51 // pred_region
              %s516 = ssub.s32 256, 1
              loop: start=0, step=1, limit=1
              $region61: #{tpu_custom_call.1} parent=59 // loop_pre_header
                _
              $region62: #{tpu_custom_call.1} parent=59 // loop_header
                %s518 = sphi 0, %s522
                %p519 = scmp.ge.s32.totalorder %s518, 1
                %s523 = sphi %s493, %s493
                %s524 = sphi %s508, %s508
              $region63: #{tpu_custom_call.1} parent=59 // loop_header_branch
                %521 = sbr.rel (%p519) target = $region67
              $region64: #{tpu_custom_call.1} parent=59 // loop_body
                %v525 = vld [vmem:[%s523] sm:%s516]
                %526 = vst [vmem:[%s524] sm:%s516] %v525
                %v527 = vld [vmem:[%s523 + $0x8] sm:%s516]
                %528 = vst [vmem:[%s524 + $0x20] sm:%s516] %v527
                %v529 = vld [vmem:[%s523 + $0x10] sm:%s516]
                %530 = vst [vmem:[%s524 + $0x40] sm:%s516] %v529
                %v531 = vld [vmem:[%s523 + $0x18] sm:%s516]
                %532 = vst [vmem:[%s524 + $0x60] sm:%s516] %v531
              $region65: #{tpu_custom_call.1} parent=59 // loop_footer
                %s522 = sadd.s32 1, %s518
              $region66: #{tpu_custom_call.1} parent=59 // loop_footer_branch
                %517 = sbr.rel target = $region62
              $region67: #{tpu_custom_call.1} parent=59 // loop_exit
                _
            $region60: #{tpu_custom_call.1} parent=51 // pred_fallthru
              _
          $region52: #{tpu_custom_call.1} parent=47 // pred_fallthru
            _
          %553 = vnop
        $region48: #{tpu_custom_call.1} parent=35 // pred_fallthru
          _
        // Predicated region
        $region83: #{tpu_custom_call.1} parent=35 // pred_check
          %p554 = pneg %p178
        $region84: #{tpu_custom_call.1} parent=35 // pred_check_branch
          %556 = sbr.rel (%p554) target = $region86
        $region85: #{tpu_custom_call.1} parent=35 // pred_region
          %s557 = smul.addr %s26, 16
          %s558 = sadd.s32 %s27, %s557
          %s559 = smul.addr %s558, 8
          %s560 = scalar_lea.vmem %s5, %s559
          // Predicated region
          $region87: #{tpu_custom_call.1} parent=85 // pred_check
            _
          $region88: #{tpu_custom_call.1} parent=85 // pred_check_branch
            %562 = sbr.rel (0) target = $region90
          $region89: #{tpu_custom_call.1} parent=85 // pred_region
            // Predicated region
            $region91: #{tpu_custom_call.1} parent=89 // pred_check
              _
            $region92: #{tpu_custom_call.1} parent=89 // pred_check_branch
              %564 = sbr.rel (0) target = $region94
            $region93: #{tpu_custom_call.1} parent=89 // pred_region
              // Predicated region
              $region106: #{tpu_custom_call.1} parent=93 // pred_check
                _
              $region107: #{tpu_custom_call.1} parent=93 // pred_check_branch
                %586 = sbr.rel (0) target = $region109
              $region108: #{tpu_custom_call.1} parent=93 // pred_region
                loop: start=0, step=1, limit=1
                $region110: #{tpu_custom_call.1} parent=108 // loop_pre_header
                  _
                $region111: #{tpu_custom_call.1} parent=108 // loop_header
                  %s588 = sphi 0, %s592
                  %p589 = scmp.ge.s32.totalorder %s588, 1
                  %s593 = sphi %s497, %s497
                  %s594 = sphi %s560, %s560
                $region112: #{tpu_custom_call.1} parent=108 // loop_header_branch
                  %591 = sbr.rel (%p589) target = $region116
                $region113: #{tpu_custom_call.1} parent=108 // loop_body
                  %v595 = vld [vmem:[%s593] sm:$0xff]
                  %596 = vst [vmem:[%s594] sm:$0xff] %v595
                  %v597 = vld [vmem:[%s593 + $0x8] sm:$0xff]
                  %598 = vst [vmem:[%s594 + $0x20] sm:$0xff] %v597
                  %v599 = vld [vmem:[%s593 + $0x10] sm:$0xff]
                  %600 = vst [vmem:[%s594 + $0x40] sm:$0xff] %v599
                  %v601 = vld [vmem:[%s593 + $0x18] sm:$0xff]
                  %602 = vst [vmem:[%s594 + $0x60] sm:$0xff] %v601
                $region114: #{tpu_custom_call.1} parent=108 // loop_footer
                  %s592 = sadd.s32 1, %s588
                $region115: #{tpu_custom_call.1} parent=108 // loop_footer_branch
                  %587 = sbr.rel target = $region111
                $region116: #{tpu_custom_call.1} parent=108 // loop_exit
                  _
              $region109: #{tpu_custom_call.1} parent=93 // pred_fallthru
                _
              // Predicated region
              $region117: #{tpu_custom_call.1} parent=93 // pred_check
                _
              $region118: #{tpu_custom_call.1} parent=93 // pred_check_branch
                %604 = sbr.rel target = $region120
              $region119: #{tpu_custom_call.1} parent=93 // pred_region
                _
              $region120: #{tpu_custom_call.1} parent=93 // pred_fallthru
                _
            $region94: #{tpu_custom_call.1} parent=89 // pred_fallthru
              _
            // Predicated region
            $region95: #{tpu_custom_call.1} parent=89 // pred_check
              _
            $region96: #{tpu_custom_call.1} parent=89 // pred_check_branch
              %566 = sbr.rel target = $region98
            $region97: #{tpu_custom_call.1} parent=89 // pred_region
              %s568 = ssub.s32 256, 1
              loop: start=0, step=1, limit=1
              $region99: #{tpu_custom_call.1} parent=97 // loop_pre_header
                _
              $region100: #{tpu_custom_call.1} parent=97 // loop_header
                %s570 = sphi 0, %s574
                %p571 = scmp.ge.s32.totalorder %s570, 1
                %s575 = sphi %s497, %s497
                %s576 = sphi %s560, %s560
              $region101: #{tpu_custom_call.1} parent=97 // loop_header_branch
                %573 = sbr.rel (%p571) target = $region105
              $region102: #{tpu_custom_call.1} parent=97 // loop_body
                %v577 = vld [vmem:[%s575] sm:%s568]
                %578 = vst [vmem:[%s576] sm:%s568] %v577
                %v579 = vld [vmem:[%s575 + $0x8] sm:%s568]
                %580 = vst [vmem:[%s576 + $0x20] sm:%s568] %v579
                %v581 = vld [vmem:[%s575 + $0x10] sm:%s568]
                %582 = vst [vmem:[%s576 + $0x40] sm:%s568] %v581
                %v583 = vld [vmem:[%s575 + $0x18] sm:%s568]
                %584 = vst [vmem:[%s576 + $0x60] sm:%s568] %v583
              $region103: #{tpu_custom_call.1} parent=97 // loop_footer
                %s574 = sadd.s32 1, %s570
              $region104: #{tpu_custom_call.1} parent=97 // loop_footer_branch
                %569 = sbr.rel target = $region100
              $region105: #{tpu_custom_call.1} parent=97 // loop_exit
                _
            $region98: #{tpu_custom_call.1} parent=89 // pred_fallthru
              _
          $region90: #{tpu_custom_call.1} parent=85 // pred_fallthru
            _
          %605 = vnop
        $region86: #{tpu_custom_call.1} parent=35 // pred_fallthru
          _
        // Predicated region
        $region121: #{tpu_custom_call.1} parent=35 // pred_check
          %p606 = pneg %p206
        $region122: #{tpu_custom_call.1} parent=35 // pred_check_branch
          %608 = sbr.rel (%p606) target = $region124
        $region123: #{tpu_custom_call.1} parent=35 // pred_region
          %s609 = smul.addr %s26, 16
          %s610 = sadd.s32 %s27, %s609
          %s611 = smul.addr %s610, 8
          %s612 = scalar_lea.vmem %s6, %s611
          // Predicated region
          $region125: #{tpu_custom_call.1} parent=123 // pred_check
            _
          $region126: #{tpu_custom_call.1} parent=123 // pred_check_branch
            %614 = sbr.rel (0) target = $region128
          $region127: #{tpu_custom_call.1} parent=123 // pred_region
            // Predicated region
            $region129: #{tpu_custom_call.1} parent=127 // pred_check
              _
            $region130: #{tpu_custom_call.1} parent=127 // pred_check_branch
              %616 = sbr.rel (0) target = $region132
            $region131: #{tpu_custom_call.1} parent=127 // pred_region
              // Predicated region
              $region144: #{tpu_custom_call.1} parent=131 // pred_check
                _
              $region145: #{tpu_custom_call.1} parent=131 // pred_check_branch
                %638 = sbr.rel (0) target = $region147
              $region146: #{tpu_custom_call.1} parent=131 // pred_region
                loop: start=0, step=1, limit=1
                $region148: #{tpu_custom_call.1} parent=146 // loop_pre_header
                  _
                $region149: #{tpu_custom_call.1} parent=146 // loop_header
                  %s640 = sphi 0, %s644
                  %p641 = scmp.ge.s32.totalorder %s640, 1
                  %s645 = sphi %s501, %s501
                  %s646 = sphi %s612, %s612
                $region150: #{tpu_custom_call.1} parent=146 // loop_header_branch
                  %643 = sbr.rel (%p641) target = $region154
                $region151: #{tpu_custom_call.1} parent=146 // loop_body
                  %v647 = vld [vmem:[%s645] sm:$0xff]
                  %648 = vst [vmem:[%s646] sm:$0xff] %v647
                  %v649 = vld [vmem:[%s645 + $0x8] sm:$0xff]
                  %650 = vst [vmem:[%s646 + $0x20] sm:$0xff] %v649
                  %v651 = vld [vmem:[%s645 + $0x10] sm:$0xff]
                  %652 = vst [vmem:[%s646 + $0x40] sm:$0xff] %v651
                  %v653 = vld [vmem:[%s645 + $0x18] sm:$0xff]
                  %654 = vst [vmem:[%s646 + $0x60] sm:$0xff] %v653
                $region152: #{tpu_custom_call.1} parent=146 // loop_footer
                  %s644 = sadd.s32 1, %s640
                $region153: #{tpu_custom_call.1} parent=146 // loop_footer_branch
                  %639 = sbr.rel target = $region149
                $region154: #{tpu_custom_call.1} parent=146 // loop_exit
                  _
              $region147: #{tpu_custom_call.1} parent=131 // pred_fallthru
                _
              // Predicated region
              $region155: #{tpu_custom_call.1} parent=131 // pred_check
                _
              $region156: #{tpu_custom_call.1} parent=131 // pred_check_branch
                %656 = sbr.rel target = $region158
              $region157: #{tpu_custom_call.1} parent=131 // pred_region
                _
              $region158: #{tpu_custom_call.1} parent=131 // pred_fallthru
                _
            $region132: #{tpu_custom_call.1} parent=127 // pred_fallthru
              _
            // Predicated region
            $region133: #{tpu_custom_call.1} parent=127 // pred_check
              _
            $region134: #{tpu_custom_call.1} parent=127 // pred_check_branch
              %618 = sbr.rel target = $region136
            $region135: #{tpu_custom_call.1} parent=127 // pred_region
              %s620 = ssub.s32 256, 1
              loop: start=0, step=1, limit=1
              $region137: #{tpu_custom_call.1} parent=135 // loop_pre_header
                _
              $region138: #{tpu_custom_call.1} parent=135 // loop_header
                %s622 = sphi 0, %s626
                %p623 = scmp.ge.s32.totalorder %s622, 1
                %s627 = sphi %s501, %s501
                %s628 = sphi %s612, %s612
              $region139: #{tpu_custom_call.1} parent=135 // loop_header_branch
                %625 = sbr.rel (%p623) target = $region143
              $region140: #{tpu_custom_call.1} parent=135 // loop_body
                %v629 = vld [vmem:[%s627] sm:%s620]
                %630 = vst [vmem:[%s628] sm:%s620] %v629
                %v631 = vld [vmem:[%s627 + $0x8] sm:%s620]
                %632 = vst [vmem:[%s628 + $0x20] sm:%s620] %v631
                %v633 = vld [vmem:[%s627 + $0x10] sm:%s620]
                %634 = vst [vmem:[%s628 + $0x40] sm:%s620] %v633
                %v635 = vld [vmem:[%s627 + $0x18] sm:%s620]
                %636 = vst [vmem:[%s628 + $0x60] sm:%s620] %v635
              $region141: #{tpu_custom_call.1} parent=135 // loop_footer
                %s626 = sadd.s32 1, %s622
              $region142: #{tpu_custom_call.1} parent=135 // loop_footer_branch
                %621 = sbr.rel target = $region138
              $region143: #{tpu_custom_call.1} parent=135 // loop_exit
                _
            $region136: #{tpu_custom_call.1} parent=127 // pred_fallthru
              _
          $region128: #{tpu_custom_call.1} parent=123 // pred_fallthru
            _
          %657 = vnop
        $region124: #{tpu_custom_call.1} parent=35 // pred_fallthru
          _
      $region36: #{tpu_custom_call.1} parent=5 // pred_fallthru
        _
      %p658 = scmp.le.s32.totalorder 2, %s17
      // Predicated region
      $region159: #{tpu_custom_call.1} parent=5 // pred_check
        %p659 = pneg %p658
      $region160: #{tpu_custom_call.1} parent=5 // pred_check_branch
        %661 = sbr.rel (%p659) target = $region162
      $region161: #{tpu_custom_call.1} parent=5 // pred_region
        %s662 = ssub.s32 %s17, 2
        // Predicated region
        $region163: #{tpu_custom_call.1} parent=161 // pred_check
          %p663 = pneg %p156
        $region164: #{tpu_custom_call.1} parent=161 // pred_check_branch
          %665 = sbr.rel (%p663) target = $region166
        $region165: #{tpu_custom_call.1} parent=161 // pred_region
          %s666 = sand.u32 %s141, 1
          %s667 = sand.u32 %s141, 1
          %s668 = smul.addr %s667, 32
          %s669 = scalar_lea.vmem [#allocation6], %s668
        $region166: #{tpu_custom_call.1} parent=161 // pred_fallthru
          _
        // Predicated region
        $region167: #{tpu_custom_call.1} parent=161 // pred_check
          %p670 = pneg %p184
        $region168: #{tpu_custom_call.1} parent=161 // pred_check_branch
          %672 = sbr.rel (%p670) target = $region170
        $region169: #{tpu_custom_call.1} parent=161 // pred_region
          %s673 = sand.u32 %s169, 1
          %s674 = sand.u32 %s169, 1
          %s675 = smul.addr %s674, 32
          %s676 = scalar_lea.vmem [#allocation7], %s675
        $region170: #{tpu_custom_call.1} parent=161 // pred_fallthru
          _
        // Predicated region
        $region171: #{tpu_custom_call.1} parent=161 // pred_check
          %p677 = pneg %p212
        $region172: #{tpu_custom_call.1} parent=161 // pred_check_branch
          %679 = sbr.rel (%p677) target = $region174
        $region173: #{tpu_custom_call.1} parent=161 // pred_region
          %s680 = sand.u32 %s197, 1
          %s681 = sand.u32 %s197, 1
          %s682 = smul.addr %s681, 32
          %s683 = scalar_lea.vmem [#allocation8], %s682
        $region174: #{tpu_custom_call.1} parent=161 // pred_fallthru
          _
      $region162: #{tpu_custom_call.1} parent=5 // pred_fallthru
        _
    $region6: #{tpu_custom_call.1} parent=1 // loop_footer
      %s21 = sadd.s32 1, %s17
    $region7: #{tpu_custom_call.1} parent=1 // loop_footer_branch
      %16 = sbr.rel target = $region3
    $region8: #{tpu_custom_call.1} parent=1 // loop_exit
      _
    %684 = vsyncpa [#allocation3], 1
    %s685 = scalar_lea.sflag [#allocation3], 1
    %686 = vsyncpa %s685, 1
    %687 = vsyncpa [#allocation5], 1

</llo_original>
